<compile_context>
chip_gen: v6e
topology: v6e:2x2x1
jax: 0.10.0
libtpu: 0.0.40
codegen_flags: <defaults>
</compile_context>

<pallas_src>
import functools

import jax
import jax.numpy as jnp
from jax.experimental import pallas as pl
from jax.experimental.pallas import tpu as pltpu

_LANE = 128
_SUBLANE = 8


def _round_up(x, m):
    return ((x + m - 1) // m) * m


def _energy_dtype():
    """bf16 tanh/energy path on v6e / v7x; f32 elsewhere (no bf16 VPU/EUP on <= v5e)."""
    try:
        kind = jax.devices()[0].device_kind.lower()
    except Exception:
        return jnp.float32
    return jnp.bfloat16 if ("v6" in kind or "v7" in kind) else jnp.float32


def attention_kernel(dec_ref, enc_ref, wdt_ref, wet_ref, b_ref, v_ref, mask_ref,
                     out_ref, sc_ref, *, energy_dtype):
    # Per grid step (i = batch tile, s = sequence tile):
    #   dec_ref:  (tb, Ddec)    f32   decoder hidden state for this batch tile
    #   enc_ref:  (ts, tb, 2E)  f32   encoder states, native (S, B, 2E) layout
    #   wdt_ref:  (Ddec, D)     bf16  decoder slice of the Linear weight, transposed
    #   wet_ref:  (2E, D)       bf16  encoder slice of the Linear weight, transposed
    #   b_ref:    (1, D)        f32   Linear bias
    #   v_ref:    (1, D)        f32   attention vector
    #   mask_ref: (S_pad, tb)   int8  0 = masked out (resident across the s axis)
    #   out_ref:  (S_pad, tb)   f32   attention weights, batch on the lane axis
    #   sc_ref:   (S_pad, tb)   f32   VMEM scratch holding raw scores across s steps
    ts, tb, e2 = enc_ref.shape
    d = wet_ref.shape[1]
    s_idx = pl.program_id(1)

    # Decoder contribution: tiny (tb x Ddec x D) matmul, recomputed per s step (cheaper
    # than carrying another scratch); never broadcast over S in HBM.
    dec_e = jnp.dot(dec_ref[...].astype(jnp.bfloat16), wdt_ref[...],
                    preferred_element_type=jnp.float32) + b_ref[...]            # (tb, D)

    # Encoder contribution: one large bf16 MXU matmul over all ts*tb rows of this step.
    # The (ts, tb) -> (ts*tb) merge is a free view because tb % 8 == 0 (f32 tiling).
    enc_rows = enc_ref[...].reshape(ts * tb, e2).astype(jnp.bfloat16)
    enc_e = jnp.dot(enc_rows, wet_ref[...],
                    preferred_element_type=jnp.float32)                          # (ts*tb, D)

    # energy = tanh(W [dec; enc] + b); bf16 on v6e/v7x, f32 on older chips.
    energy = jnp.tanh((enc_e.reshape(ts, tb, d) + dec_e[None, :, :]).astype(energy_dtype))

    # scores[s, b] = <v, energy[s, b, :]> : VPU multiply + lane reduce, f32 accumulate.
    weighted = energy * v_ref[...].astype(energy_dtype)                          # (ts, tb, D)
    scores = jnp.sum(weighted.astype(jnp.float32), axis=-1)                      # (ts, tb)

    row0 = pl.multiple_of(s_idx * ts, _SUBLANE)
    sc_ref[pl.ds(row0, ts), :] = scores

    # Finalize on the last sequence step: fold the mask in as an additive bias and run
    # the softmax over the sequence (sublane) axis; lane axis = batch -> dense stores.
    @pl.when(s_idx == pl.num_programs(1) - 1)
    def _():
        bias = jnp.where(mask_ref[...].astype(jnp.int32) == 0,
                         jnp.float32(-1e10), jnp.float32(0.0))
        sc = sc_ref[...] + bias
        sc = sc - jnp.max(sc, axis=0, keepdims=True)
        e = jnp.exp(sc)
        # denom is one scalar per batch column: plain divide (no approx/Newton needed).
        out_ref[...] = e / jnp.sum(e, axis=0, keepdims=True)


def _vmem_estimate(tb, ts, s_pad, e2, d, d_dec, enc_bytes, energy_bytes):
    """Rough VMEM footprint (bytes) of one grid step, including f32 intermediates."""
    d_ln = _round_up(max(d, _LANE), _LANE)
    e2_ln = _round_up(max(e2, _LANE), _LANE)
    ddec_ln = _round_up(max(d_dec, _LANE), _LANE)
    tb_ln = _round_up(max(tb, _LANE), _LANE)
    per_step = (2 * ts * tb * e2_ln * enc_bytes      # encoder block (double buffered)
                + ts * tb * e2_ln * 2                # bf16 cast of the encoder block
                + ts * tb * d_ln * 4                 # enc_e (f32 MXU result)
                + ts * tb * d_ln * energy_bytes      # energy / weighted-energy intermediate
                + ts * tb_ln * 4)                    # per-step score slice
    resident = (s_pad * tb_ln * 4                    # scores scratch
                + 2 * s_pad * tb_ln * 4              # output block (double buffered)
                + s_pad * tb_ln * 1                  # int8 mask block
                + 2 * tb * ddec_ln * 4               # decoder block
                + (d_dec + e2) * d_ln * 2            # bf16 weights
                + 2 * d_ln * 4)                      # Linear bias + v
    return per_step + resident


def _choose_tiles(B, S, e2, d, d_dec, enc_bytes, energy_bytes,
                  vmem_budget=24 * 1024 * 1024):
    """Pick (batch tile, seq tile): the largest block whose FULL footprint fits VMEM.

    No minimum-step-count is forced: one big step is optimal on 1-TC chips (v5e/v6e),
    and batches >= 256 naturally give >= 2 parallel batch steps for v7x's 2 TensorCores.
    """
    if B <= _LANE:
        tb = _round_up(B, _SUBLANE)          # single batch tile; block == full batch dim
        grid_b = 1
    else:
        tb = _LANE                           # lane-dense output stores (and %128 BlockSpec rule)
        grid_b = -(-B // tb)
    b_pad = tb * grid_b

    s_pad8 = _round_up(S, _SUBLANE)
    ts = _round_up(min(s_pad8, 4096), _SUBLANE)
    while ts > _SUBLANE and _vmem_estimate(tb, ts, s_pad8, e2, d, d_dec,
                                           enc_bytes, energy_bytes) > vmem_budget:
        ts -= _SUBLANE
    grid_s = -(-s_pad8 // ts)
    ts = _round_up(-(-s_pad8 // grid_s), _SUBLANE)   # re-balance so S padding stays minimal
    s_pad = ts * grid_s
    return tb, grid_b, b_pad, ts, grid_s, s_pad


def attention_forward(decoder_hidden, encoder_hiddens, mask, w, b, v):
    """
    decoder_hidden:  (B, decoder_dim)
    encoder_hiddens: (S, B, 2*encoder_dim)
    mask:            (B, S)   (0 = masked out)
    w:               (decoder_dim, decoder_dim + 2*encoder_dim)  (PyTorch Linear weight)
    b:               (decoder_dim,)
    v:               (decoder_dim,)
    returns:         (B, S) softmax attention weights
    """
    S, B, E2 = encoder_hiddens.shape
    Ddec = decoder_hidden.shape[1]
    w = jnp.asarray(w, jnp.float32)
    D = w.shape[0]                                   # == decoder_dim

    edt = _energy_dtype()
    enc = jnp.asarray(encoder_hiddens)
    dec = jnp.asarray(decoder_hidden)
    enc_bytes = jnp.dtype(enc.dtype).itemsize
    tb, grid_b, B_pad, ts, grid_s, S_pad = _choose_tiles(
        B, S, E2, D, Ddec, enc_bytes, jnp.dtype(edt).itemsize)

    # Split the Linear weight: cat order in the torch module is (decoder, encoder).
    wdt = w[:, :Ddec].T.astype(jnp.bfloat16)         # (Ddec, D)
    wet = w[:, Ddec:].T.astype(jnp.bfloat16)         # (2E,   D)
    b2 = jnp.asarray(b, jnp.float32).reshape(1, D)
    v2 = jnp.asarray(v, jnp.float32).reshape(1, D)

    # Encoder/decoder are consumed in their native layout & dtype (no transpose / bf16
    # copy in HBM); only pad when the tile grid actually needs it.
    if B_pad != B:
        dec = jnp.pad(dec, ((0, B_pad - B), (0, 0)))
    if (S_pad, B_pad) != (S, B):
        enc = jnp.pad(enc, ((0, S_pad - S), (0, B_pad - B), (0, 0)))
    # int8 mask in (S, B) layout; padded rows / batch columns are masked (0).
    mask_t = jnp.transpose(jnp.asarray(mask) != 0).astype(jnp.int8)
    if (S_pad, B_pad) != (S, B):
        mask_t = jnp.pad(mask_t, ((0, S_pad - S), (0, B_pad - B)))

    kernel = functools.partial(attention_kernel, energy_dtype=edt)

    cost = pl.CostEstimate(
        flops=int(2 * B_pad * S_pad * E2 * D            # encoder matmul
                  + 2 * B_pad * Ddec * D * grid_s       # decoder matmul (per s step)
                  + 2 * B_pad * S_pad * D),             # v-weighted reduce
        transcendentals=int(B_pad * S_pad * D),         # tanh
        bytes_accessed=int(enc.size * enc.dtype.itemsize + dec.size * dec.dtype.itemsize
                           + mask_t.size + B_pad * S_pad * 4
                           + (wdt.size + wet.size) * 2 + (b2.size + v2.size) * 4),
    )

    out = pl.pallas_call(
        kernel,
        out_shape=jax.ShapeDtypeStruct((S_pad, B_pad), jnp.float32),
        grid_spec=pltpu.PrefetchScalarGridSpec(
            num_scalar_prefetch=0,
            grid=(grid_b, grid_s),
            in_specs=[
                pl.BlockSpec((tb, Ddec), lambda i, s: (i, 0)),        # decoder hidden
                pl.BlockSpec((ts, tb, E2), lambda i, s: (s, i, 0)),   # encoder states (S,B,2E)
                pl.BlockSpec((Ddec, D), lambda i, s: (0, 0)),         # W_dec^T (shared)
                pl.BlockSpec((E2, D), lambda i, s: (0, 0)),           # W_enc^T (shared)
                pl.BlockSpec((1, D), lambda i, s: (0, 0)),            # Linear bias
                pl.BlockSpec((1, D), lambda i, s: (0, 0)),            # v
                pl.BlockSpec((S_pad, tb), lambda i, s: (0, i)),       # int8 mask (resident over s)
            ],
            out_specs=pl.BlockSpec((S_pad, tb), lambda i, s: (0, i)), # resident over s
            scratch_shapes=[pltpu.VMEM((S_pad, tb), jnp.float32)],    # raw scores
        ),
        compiler_params=pltpu.CompilerParams(
            dimension_semantics=("parallel", "arbitrary"),
            vmem_limit_bytes=48 * 1024 * 1024),
        cost_estimate=cost,
    )(dec, enc, wdt, wet, b2, v2, mask_t)

    # Padded (fully-masked) batch columns come out as uniform 1/S_pad rows; they are
    # sliced off here and must never be consumed directly.
    return out[:S, :B].T


def attention_reference(decoder_hidden, encoder_hiddens, mask, w, b, v):
    """Pure-JAX f32 reference mirroring the PyTorch forward."""
    S, B, _ = encoder_hiddens.shape
    dec = jnp.broadcast_to(decoder_hidden[:, None, :], (B, S, decoder_hidden.shape[1]))
    enc = jnp.transpose(encoder_hiddens, (1, 0, 2))
    cat = jnp.concatenate([dec, enc], axis=2)
    energy = jnp.tanh(jnp.einsum("bsi,oi->bso", cat, w) + b)          # (B, S, D)
    attention = jnp.einsum("d,bsd->bs", v, energy)                    # (B, S)
    attention = jnp.where(mask == 0, -1e10, attention)
    return jax.nn.softmax(attention, axis=1)


if __name__ == "__main__":
    encoder_dim = 16
    decoder_dim = 32
    S = 8        # max input sentence length
    B = 2        # batch size
    Din = 2 * encoder_dim + decoder_dim

    key = jax.random.PRNGKey(0)
    k1, k2, k3, k4, k5 = jax.random.split(key, 5)

    # Deterministic parameter init (shapes match nn.Linear / nn.Parameter in __init__).
    bound = 1.0 / jnp.sqrt(Din)
    w = jax.random.uniform(k1, (decoder_dim, Din), jnp.float32, -bound, bound)
    b = jax.random.uniform(k2, (decoder_dim,), jnp.float32, -bound, bound)
    v = jax.random.uniform(k3, (decoder_dim,), jnp.float32, 0.0, 1.0)  # torch.rand

    # Inputs.
    decoder_hidden = jax.random.normal(k4, (B, decoder_dim), jnp.float32)
    encoder_hiddens = jax.random.normal(k5, (S, B, 2 * encoder_dim), jnp.float32)
    lengths = jnp.array([S, 5], dtype=jnp.int32)
    mask = (jnp.arange(S)[None, :] < lengths[:, None]).astype(jnp.int32)  # (B, S)

    out = attention_forward(decoder_hidden, encoder_hiddens, mask, w, b, v)
    out = jax.block_until_ready(out)

    ref = attention_reference(decoder_hidden, encoder_hiddens, mask, w, b, v)
    assert out.shape == (B, S)
    # bf16 matmul (and bf16 tanh on v6e/v7x) -> tolerance loosened vs. the f32 reference.
    assert jnp.allclose(out, ref, atol=3e-2, rtol=3e-2), (out, ref)
    assert jnp.allclose(jnp.sum(out, axis=1), 1.0, atol=1e-4)

    print("KERNEL_OK")
</pallas_src>

<mosaic_0001>
module attributes {stable_mosaic.version = 11 : i64} {
  func.func @attention_kernel(%arg0: i32, %arg1: i32, %arg2: memref<8x32xf32, #tpu.memory_space<vmem>>, %arg3: memref<8x8x32xf32, #tpu.memory_space<vmem>>, %arg4: memref<32x32xbf16, #tpu.memory_space<vmem>>, %arg5: memref<32x32xbf16, #tpu.memory_space<vmem>>, %arg6: memref<1x32xf32, #tpu.memory_space<vmem>>, %arg7: memref<1x32xf32, #tpu.memory_space<vmem>>, %arg8: memref<8x8xi8, #tpu.memory_space<vmem>>, %arg9: memref<8x8xf32, #tpu.memory_space<vmem>>, %arg10: memref<8x8xf32, #tpu.memory_space<vmem>>) attributes {dimension_semantics = [#tpu.dimension_semantics<parallel>, #tpu.dimension_semantics<arbitrary>], iteration_bounds = array<i64: 1, 1>, scalar_prefetch = 0 : i64, scratch_operands = 1 : i64, tpu.core_type = #tpu.core_type<tc>, window_params = [{transform_indices = @transform_0, window_bounds = array<i64: 8, 32>}, {transform_indices = @transform_1, window_bounds = array<i64: 8, 8, 32>}, {pipeline_mode = #tpu.pipeline_mode<synchronous>, transform_indices = @transform_2, window_bounds = array<i64: 32, 32>}, {pipeline_mode = #tpu.pipeline_mode<synchronous>, transform_indices = @transform_3, window_bounds = array<i64: 32, 32>}, {pipeline_mode = #tpu.pipeline_mode<synchronous>, transform_indices = @transform_4, window_bounds = array<i64: 1, 32>}, {pipeline_mode = #tpu.pipeline_mode<synchronous>, transform_indices = @transform_5, window_bounds = array<i64: 1, 32>}, {transform_indices = @transform_6, window_bounds = array<i64: 8, 8>}, {transform_indices = @transform_7, window_bounds = array<i64: 8, 8>}]} {
    %c0 = arith.constant 0 : index
    %c0_0 = arith.constant 0 : index
    %0 = vector.load %arg2[%c0, %c0_0] : memref<8x32xf32, #tpu.memory_space<vmem>>, vector<8x32xf32>
    %1 = arith.truncf %0 : vector<8x32xf32> to vector<8x32xbf16>
    %c0_1 = arith.constant 0 : index
    %c0_2 = arith.constant 0 : index
    %2 = vector.load %arg4[%c0_1, %c0_2] : memref<32x32xbf16, #tpu.memory_space<vmem>>, vector<32x32xbf16>
    %cst = arith.constant dense<0.000000e+00> : vector<8x32xf32>
    %3 = tpu.matmul %1, %2, %cst {dimension_numbers = #tpu.dot_dimension_numbers<[1], [0], [0], [1], [0, 0, 1, 1], [], []>} : vector<8x32xbf16>, vector<32x32xbf16>, vector<8x32xf32> -> vector<8x32xf32>
    %c0_3 = arith.constant 0 : index
    %c0_4 = arith.constant 0 : index
    %4 = vector.load %arg6[%c0_3, %c0_4] : memref<1x32xf32, #tpu.memory_space<vmem>>, vector<1x32xf32>
    %5 = vector.broadcast %4 : vector<1x32xf32> to vector<8x32xf32>
    %6 = arith.addf %3, %5 : vector<8x32xf32>
    %c0_5 = arith.constant 0 : index
    %c0_6 = arith.constant 0 : index
    %c0_7 = arith.constant 0 : index
    %7 = vector.load %arg3[%c0_5, %c0_6, %c0_7] : memref<8x8x32xf32, #tpu.memory_space<vmem>>, vector<8x8x32xf32>
    %8 = vector.shape_cast %7 : vector<8x8x32xf32> to vector<64x32xf32>
    %9 = arith.truncf %8 : vector<64x32xf32> to vector<64x32xbf16>
    %c0_8 = arith.constant 0 : index
    %c0_9 = arith.constant 0 : index
    %10 = vector.load %arg5[%c0_8, %c0_9] : memref<32x32xbf16, #tpu.memory_space<vmem>>, vector<32x32xbf16>
    %cst_10 = arith.constant dense<0.000000e+00> : vector<64x32xf32>
    %11 = tpu.matmul %9, %10, %cst_10 {dimension_numbers = #tpu.dot_dimension_numbers<[1], [0], [0], [1], [0, 0, 1, 1], [], []>} : vector<64x32xbf16>, vector<32x32xbf16>, vector<64x32xf32> -> vector<64x32xf32>
    %12 = vector.shape_cast %11 : vector<64x32xf32> to vector<8x8x32xf32>
    %13 = vector.shape_cast %6 : vector<8x32xf32> to vector<1x8x32xf32>
    %14 = vector.broadcast %13 : vector<1x8x32xf32> to vector<8x8x32xf32>
    %15 = arith.addf %12, %14 : vector<8x8x32xf32>
    %16 = math.tanh %15 : vector<8x8x32xf32>
    %c0_11 = arith.constant 0 : index
    %c0_12 = arith.constant 0 : index
    %17 = vector.load %arg7[%c0_11, %c0_12] : memref<1x32xf32, #tpu.memory_space<vmem>>, vector<1x32xf32>
    %18 = vector.shape_cast %17 : vector<1x32xf32> to vector<1x1x32xf32>
    %19 = vector.broadcast %18 : vector<1x1x32xf32> to vector<8x8x32xf32>
    %20 = arith.mulf %16, %19 : vector<8x8x32xf32>
    %cst_13 = arith.constant dense<0.000000e+00> : vector<8x8xf32>
    %21 = vector.multi_reduction <add>, %20, %cst_13 [2] : vector<8x8x32xf32> to vector<8x8xf32>
    %c8_i32 = arith.constant 8 : i32
    %22 = arith.muli %arg1, %c8_i32 : i32
    %23 = tpu.assume_multiple %22, 8 : i32
    %24 = arith.index_cast %23 : i32 to index
    %c0_14 = arith.constant 0 : index
    %25 = vector.load %arg10[%24, %c0_14] : memref<8x8xf32, #tpu.memory_space<vmem>>, vector<8x8xf32>
    tpu.vector_store %arg10[%24, %c0_14], %21 {strides = array<i32>} : memref<8x8xf32, #tpu.memory_space<vmem>>, vector<8x8xf32>,
    %c0_i32 = arith.constant 0 : i32
    %26 = arith.cmpi eq, %arg1, %c0_i32 : i32
    %27 = arith.extui %26 : i1 to i32
    %c0_i32_15 = arith.constant 0 : i32
    %28 = arith.cmpi ne, %27, %c0_i32_15 : i32
    scf.if %28 {
      %c0_16 = arith.constant 0 : index
      %c0_17 = arith.constant 0 : index
      %29 = vector.load %arg8[%c0_16, %c0_17] : memref<8x8xi8, #tpu.memory_space<vmem>>, vector<8x8xi8>
      %30 = arith.extsi %29 : vector<8x8xi8> to vector<8x8xi32>
      %c0_i32_18 = arith.constant 0 : i32
      %31 = vector.broadcast %c0_i32_18 : i32 to vector<8x8xi32>
      %32 = arith.cmpi eq, %30, %31 : vector<8x8xi32>
      %cst_19 = arith.constant -1.000000e+10 : f32
      %cst_20 = arith.constant 0.000000e+00 : f32
      %33 = vector.broadcast %cst_19 : f32 to vector<8x8xf32>
      %34 = vector.broadcast %cst_20 : f32 to vector<8x8xf32>
      %35 = arith.select %32, %33, %34 : vector<8x8xi1>, vector<8x8xf32>
      %c0_21 = arith.constant 0 : index
      %c0_22 = arith.constant 0 : index
      %36 = vector.load %arg10[%c0_21, %c0_22] : memref<8x8xf32, #tpu.memory_space<vmem>>, vector<8x8xf32>
      %37 = arith.addf %36, %35 : vector<8x8xf32>
      %cst_23 = arith.constant dense<0xFF800000> : vector<8xf32>
      %38 = vector.multi_reduction <maximumf>, %37, %cst_23 [0] : vector<8x8xf32> to vector<8xf32>
      %39 = vector.shape_cast %38 : vector<8xf32> to vector<1x8xf32>
      %40 = vector.broadcast %39 : vector<1x8xf32> to vector<8x8xf32>
      %41 = arith.subf %37, %40 : vector<8x8xf32>
      %42 = math.exp %41 : vector<8x8xf32>
      %cst_24 = arith.constant dense<0.000000e+00> : vector<8xf32>
      %43 = vector.multi_reduction <add>, %42, %cst_24 [0] : vector<8x8xf32> to vector<8xf32>
      %44 = vector.shape_cast %43 : vector<8xf32> to vector<1x8xf32>
      %45 = vector.broadcast %44 : vector<1x8xf32> to vector<8x8xf32>
      %46 = arith.divf %42, %45 : vector<8x8xf32>
      %c0_25 = arith.constant 0 : index
      %c0_26 = arith.constant 0 : index
      %47 = vector.load %arg9[%c0_25, %c0_26] : memref<8x8xf32, #tpu.memory_space<vmem>>, vector<8x8xf32>
      tpu.vector_store %arg9[%c0_25, %c0_26], %46 {strides = array<i32>} : memref<8x8xf32, #tpu.memory_space<vmem>>, vector<8x8xf32>,
    } else {
    }
    return
  }
  func.func @transform_0(%arg0: i32, %arg1: i32) -> (i32, i32) {
    %c0_i32 = arith.constant 0 : i32
    %c0_i32_0 = arith.constant 0 : i32
    return %arg0, %c0_i32 : i32, i32
  }
  func.func @transform_1(%arg0: i32, %arg1: i32) -> (i32, i32, i32) {
    %c0_i32 = arith.constant 0 : i32
    %c0_i32_0 = arith.constant 0 : i32
    return %arg1, %arg0, %c0_i32 : i32, i32, i32
  }
  func.func @transform_2(%arg0: i32, %arg1: i32) -> (i32, i32) {
    %c0_i32 = arith.constant 0 : i32
    %c0_i32_0 = arith.constant 0 : i32
    %c0_i32_1 = arith.constant 0 : i32
    return %c0_i32, %c0_i32_0 : i32, i32
  }
  func.func @transform_3(%arg0: i32, %arg1: i32) -> (i32, i32) {
    %c0_i32 = arith.constant 0 : i32
    %c0_i32_0 = arith.constant 0 : i32
    %c0_i32_1 = arith.constant 0 : i32
    return %c0_i32, %c0_i32_0 : i32, i32
  }
  func.func @transform_4(%arg0: i32, %arg1: i32) -> (i32, i32) {
    %c0_i32 = arith.constant 0 : i32
    %c0_i32_0 = arith.constant 0 : i32
    %c0_i32_1 = arith.constant 0 : i32
    return %c0_i32, %c0_i32_0 : i32, i32
  }
  func.func @transform_5(%arg0: i32, %arg1: i32) -> (i32, i32) {
    %c0_i32 = arith.constant 0 : i32
    %c0_i32_0 = arith.constant 0 : i32
    %c0_i32_1 = arith.constant 0 : i32
    return %c0_i32, %c0_i32_0 : i32, i32
  }
  func.func @transform_6(%arg0: i32, %arg1: i32) -> (i32, i32) {
    %c0_i32 = arith.constant 0 : i32
    %c0_i32_0 = arith.constant 0 : i32
    return %c0_i32, %arg0 : i32, i32
  }
  func.func @transform_7(%arg0: i32, %arg1: i32) -> (i32, i32) {
    %c0_i32 = arith.constant 0 : i32
    %c0_i32_0 = arith.constant 0 : i32
    return %c0_i32, %arg0 : i32, i32
  }
}

</mosaic_0001>

<llo_original>
// kernel: tpu_custom_call.1
$region0: #{tpu_custom_call.1}
  #allocation0 [shape = 'u32[]', space=smem, size = 0x4, offset = 0x4, fixed_abs, tag = 'smem constant byte address 0x4 - core index']
  #allocation1 [shape = 'u32[144,128]{1,0:T(1,128)}', space=vmem, size = 0x12000, scoped, tag = 'internal scratch']
  #allocation2 [shape = 'f32[8,8]{1,0:T(8,128)}', space=vmem, size = 0x1000, scoped, tag = 'scratch operand']
  %s0 = inlined_call_operand.hbm [shape: f32[8,32], index: 0, kind: input, shape index: {}]
  %s1 = inlined_call_operand.hbm [shape: f32[8,8,32], index: 1, kind: input, shape index: {}]
  %s2 = inlined_call_operand.hbm [shape: bf16[32,32], index: 2, kind: input, shape index: {}]
  %s3 = inlined_call_operand.hbm [shape: bf16[32,32], index: 3, kind: input, shape index: {}]
  %s4 = inlined_call_operand.vmem [shape: f32[1,32], index: 4, kind: input, shape index: {}]
  %s5 = inlined_call_operand.vmem [shape: f32[1,32], index: 5, kind: input, shape index: {}]
  %s6 = inlined_call_operand.vmem [shape: s8[8,8], index: 6, kind: input, shape index: {}]
  %s7 = inlined_call_operand.hbm [shape: f32[8,8], index: 7, kind: output, shape index: {}]
  %s8 = sld [smem:[#allocation0]]
  $region58: #{tpu_custom_call.1} parent=0
    _
  %s10 = ssub.s32 1, %s8
  %s11 = scalar_select 0, %s10, %s8
  $region1: #{tpu_custom_call.1} parent=0
    #allocation3 [shape = 'u8[4096]{0}', space=vmem, size = 0x1000, scoped, tag = 'input window, operand 0, single buffered']
    #allocation4 [shape = 's32[1]{0}', space=sflag, size = 0x4, scoped, tag = 'scoped memory for tpu_custom_call.1']
    #allocation5 [shape = 's32[1]{0}', space=sflag, size = 0x4, scoped, tag = 'scoped memory for tpu_custom_call.1']
    #allocation6 [shape = 'u8[32768]{0}', space=vmem, size = 0x8000, scoped, tag = 'input window, operand 1, single buffered']
    #allocation7 [shape = 's32[1]{0}', space=sflag, size = 0x4, scoped, tag = 'scoped memory for tpu_custom_call.1']
    #allocation8 [shape = 'u8[8192]{0}', space=vmem, size = 0x2000, scoped, tag = 'input window, operand 2, single buffered']
    #allocation9 [shape = 'u8[8192]{0}', space=vmem, size = 0x2000, scoped, tag = 'input window, operand 3, single buffered']
    #allocation10 [shape = 's32[1]{0}', space=sflag, size = 0x4, scoped, tag = 'scoped memory for tpu_custom_call.1']
    #allocation11 [shape = 'u8[4096]{0}', space=vmem, size = 0x1000, scoped, tag = 'output window, operand 0, single buffered']
    %12 = vsyncpa [#allocation4], 0
    %13 = vsyncpa [#allocation7], 0
    %14 = vsyncpa [#allocation10], 0
    %15 = vsyncpa [#allocation5], 0
    // Predicated region
    $region2: #{tpu_custom_call.1} parent=1 // pred_check
      _
    $region3: #{tpu_custom_call.1} parent=1 // pred_check_branch
      %17 = sbr.rel (0) target = $region5
    $region4: #{tpu_custom_call.1} parent=1 // pred_region
      %s19 = ssub.s32 128, 128
      %20 = vsyncadd [#allocation4], %s19
      %s22 = sshll.u32 [#allocation3], 4
      %s23 = int_to_ptr.vmem [resolvable:$true] %s22
      %25 = dma.hbm_to_vmem [thread:$0]  %s0, 128, %s23, [#allocation4]
    $region5: #{tpu_custom_call.1} parent=1 // pred_fallthru
      _
    // Predicated region
    $region6: #{tpu_custom_call.1} parent=1 // pred_check
      _
    $region7: #{tpu_custom_call.1} parent=1 // pred_check_branch
      %27 = sbr.rel (0) target = $region9
    $region8: #{tpu_custom_call.1} parent=1 // pred_region
      %s29 = ssub.s32 1024, 1024
      %30 = vsyncadd [#allocation7], %s29
      %s31 = sshll.u32 [#allocation6], 4
      %s32 = int_to_ptr.vmem [resolvable:$true] %s31
      %37 = dma.hbm_to_vmem [thread:$0]  %s1, 1024, %s32, [#allocation7], 128, 128, 8
    $region9: #{tpu_custom_call.1} parent=1 // pred_fallthru
      _
    // Predicated region
    $region10: #{tpu_custom_call.1} parent=1 // pred_check
      _
    $region11: #{tpu_custom_call.1} parent=1 // pred_check_branch
      %39 = sbr.rel (0) target = $region13
    $region12: #{tpu_custom_call.1} parent=1 // pred_region
      %s41 = ssub.s32 256, 256
      %42 = vsyncadd [#allocation7], %s41
      %s43 = sshll.u32 [#allocation8], 4
      %s44 = int_to_ptr.vmem [resolvable:$true] %s43
      %49 = dma.hbm_to_vmem [thread:$0]  %s2, 256, %s44, [#allocation7], 64, 64, 4
    $region13: #{tpu_custom_call.1} parent=1 // pred_fallthru
      _
    // Predicated region
    $region14: #{tpu_custom_call.1} parent=1 // pred_check
      _
    $region15: #{tpu_custom_call.1} parent=1 // pred_check_branch
      %51 = sbr.rel (0) target = $region17
    $region16: #{tpu_custom_call.1} parent=1 // pred_region
      %s53 = ssub.s32 256, 256
      %54 = vsyncadd [#allocation10], %s53
      %s55 = sshll.u32 [#allocation9], 4
      %s56 = int_to_ptr.vmem [resolvable:$true] %s55
      %61 = dma.hbm_to_vmem [thread:$0]  %s3, 256, %s56, [#allocation10], 64, 64, 4
    $region17: #{tpu_custom_call.1} parent=1 // pred_fallthru
      _
    // Predicated region
    $region18: #{tpu_custom_call.1} parent=1 // pred_check
      _
    $region19: #{tpu_custom_call.1} parent=1 // pred_check_branch
      %63 = sbr.rel (0) target = $region21
    $region20: #{tpu_custom_call.1} parent=1 // pred_region
      _
    $region21: #{tpu_custom_call.1} parent=1 // pred_fallthru
      _
    // Predicated region
    $region22: #{tpu_custom_call.1} parent=1 // pred_check
      _
    $region23: #{tpu_custom_call.1} parent=1 // pred_check_branch
      %65 = sbr.rel (0) target = $region25
    $region24: #{tpu_custom_call.1} parent=1 // pred_region
      _
    $region25: #{tpu_custom_call.1} parent=1 // pred_fallthru
      _
    // Predicated region
    $region26: #{tpu_custom_call.1} parent=1 // pred_check
      _
    $region27: #{tpu_custom_call.1} parent=1 // pred_check_branch
      %67 = sbr.rel (0) target = $region29
    $region28: #{tpu_custom_call.1} parent=1 // pred_region
      _
    $region29: #{tpu_custom_call.1} parent=1 // pred_fallthru
      _
    // Predicated region
    $region30: #{tpu_custom_call.1} parent=1 // pred_check
      _
    $region31: #{tpu_custom_call.1} parent=1 // pred_check_branch
      %69 = sbr.rel (0) target = $region33
    $region32: #{tpu_custom_call.1} parent=1 // pred_region
      %70 = dma.done [#allocation4], 128
    $region33: #{tpu_custom_call.1} parent=1 // pred_fallthru
      _
    // Predicated region
    $region34: #{tpu_custom_call.1} parent=1 // pred_check
      _
    $region35: #{tpu_custom_call.1} parent=1 // pred_check_branch
      %72 = sbr.rel (0) target = $region37
    $region36: #{tpu_custom_call.1} parent=1 // pred_region
      %73 = dma.done [#allocation7], 1024
    $region37: #{tpu_custom_call.1} parent=1 // pred_fallthru
      _
    // Predicated region
    $region38: #{tpu_custom_call.1} parent=1 // pred_check
      _
    $region39: #{tpu_custom_call.1} parent=1 // pred_check_branch
      %75 = sbr.rel (0) target = $region41
    $region40: #{tpu_custom_call.1} parent=1 // pred_region
      %76 = dma.done [#allocation7], 256
    $region41: #{tpu_custom_call.1} parent=1 // pred_fallthru
      _
    // Predicated region
    $region42: #{tpu_custom_call.1} parent=1 // pred_check
      _
    $region43: #{tpu_custom_call.1} parent=1 // pred_check_branch
      %78 = sbr.rel (0) target = $region45
    $region44: #{tpu_custom_call.1} parent=1 // pred_region
      %79 = dma.done [#allocation10], 256
    $region45: #{tpu_custom_call.1} parent=1 // pred_fallthru
      _
    %v81 = vld [vmem:[#allocation3] sm:$0xff]
    %v82 = vpack.c.bf16 %v81, %v81
    %v83 = vld [vmem:[#allocation8] sm:$0xf]
    %v84 = vld [vmem:[#allocation8 + $0x4] sm:$0xf]
    %v85 = vld [vmem:[#allocation8 + $0x8] sm:$0xf]
    %v86 = vld [vmem:[#allocation8 + $0xc] sm:$0xf]
    %v87 = vld [vmem:[%s4] sm:$0x1]
    %v89 = vlaneseq
    %v90 = vshrl.u32 %v89, 7
    %v91 = vsub.s32 0, %v90
    %v92 = vrot.slane %v87, %v91
    %v98 = vunpack.c.l.b16 %v83
    %v99 = vunpack.c.l.b16 %v84
    %v100 = vunpack.c.l.b16 %v85
    %v101 = vunpack.c.l.b16 %v86
    %v102 = vpack.c.b16 %v99, %v98
    %v103 = vpack.c.b16 %v101, %v100
    %vm106 = vcmask 261120
    %v108 = vsel %vm106, %v82, 0
    %110 = vmatprep.subr.bf16.mxu0 0
    %111 = vmatpush1.bf16.msra.mxu0 0
    %112 = vmatprep.subr.bf16.mxu0 0
    %113 = vmatpush1.bf16.msra.mxu0 0
    %114 = vmatprep.subr.bf16.mxu0 0
    %115 = vmatpush1.bf16.msra.mxu0 0
    %116 = vmatprep.subr.bf16.mxu0 0
    %117 = vmatpush1.bf16.msra.mxu0 0
    %118 = vmatprep.subr.bf16.mxu0 0
    %119 = vmatpush1.bf16.msra.mxu0 0
    %120 = vmatprep.subr.bf16.mxu0 0
    %121 = vmatpush1.bf16.msra.mxu0 0
    %122 = vmatprep.subr.bf16.mxu0 0
    %123 = vmatpush1.bf16.msra.mxu0 %v103
    %124 = vmatprep.subr.bf16.mxu0 0
    %125 = vmatpush1.bf16.msra.mxu0 %v102
    %126 = vmatprep.subr.bf16.mxu0 0
    %127 = vmatpush2.bf16.msra.mxu0 0
    %128 = vmatprep.subr.bf16.mxu0 0
    %129 = vmatpush2.bf16.msra.mxu0 0
    %130 = vmatprep.subr.bf16.mxu0 0
    %131 = vmatpush2.bf16.msra.mxu0 0
    %132 = vmatprep.subr.bf16.mxu0 0
    %133 = vmatpush2.bf16.msra.mxu0 0
    %134 = vmatprep.subr.bf16.mxu0 0
    %135 = vmatpush2.bf16.msra.mxu0 0
    %136 = vmatprep.subr.bf16.mxu0 0
    %137 = vmatpush2.bf16.msra.mxu0 0
    %138 = vmatprep.subr.bf16.mxu0 0
    %139 = vmatpush2.bf16.msra.mxu0 0
    %140 = vmatprep.subr.bf16.mxu0 0
    %141 = vmatpush2.bf16.msra.mxu0 0
    %142 = vmatprep.mubr.bf16.mxu0 0
    %143 = vmatmul.mubr.bf16.gmra.mxu0 %v108
    %v144 = vpop.f32.mrf.mxu0
    %v145 = vadd.f32 %v92, %v144
    %v146 = vpop.f32.mrf.mxu0
    %v147 = vpop.f32.mrf.mxu0
    %v148 = vpop.f32.mrf.mxu0
    %149 = vdwg.mxu0
    %v150 = vld [vmem:[#allocation6] sm:$0xff]
    %v151 = vld [vmem:[#allocation6 + $0x8] sm:$0xff]
    %v152 = vld [vmem:[#allocation6 + $0x10] sm:$0xff]
    %v153 = vld [vmem:[#allocation6 + $0x18] sm:$0xff]
    %v154 = vld [vmem:[#allocation6 + $0x20] sm:$0xff]
    %v155 = vld [vmem:[#allocation6 + $0x28] sm:$0xff]
    %v156 = vld [vmem:[#allocation6 + $0x30] sm:$0xff]
    %v157 = vld [vmem:[#allocation6 + $0x38] sm:$0xff]
    %v158 = vpack.c.bf16 %v151, %v150
    %v159 = vpack.c.bf16 %v153, %v152
    %v160 = vpack.c.bf16 %v155, %v154
    %v161 = vpack.c.bf16 %v157, %v156
    %v162 = vld [vmem:[#allocation9] sm:$0xf]
    %v163 = vld [vmem:[#allocation9 + $0x4] sm:$0xf]
    %v164 = vld [vmem:[#allocation9 + $0x8] sm:$0xf]
    %v165 = vld [vmem:[#allocation9 + $0xc] sm:$0xf]
    %v170 = vunpack.c.l.b16 %v162
    %v171 = vunpack.c.l.b16 %v163
    %v172 = vunpack.c.l.b16 %v164
    %v173 = vunpack.c.l.b16 %v165
    %v174 = vpack.c.b16 %v171, %v170
    %v175 = vpack.c.b16 %v173, %v172
    %v179 = vsel %vm106, %v158, 0
    %v182 = vsel %vm106, %v159, 0
    %v185 = vsel %vm106, %v160, 0
    %v188 = vsel %vm106, %v161, 0
    %190 = vmatprep.subr.bf16.mxu0 0
    %191 = vmatpush1.bf16.msra.mxu0 0
    %192 = vmatprep.subr.bf16.mxu0 0
    %193 = vmatpush1.bf16.msra.mxu0 0
    %194 = vmatprep.subr.bf16.mxu0 0
    %195 = vmatpush1.bf16.msra.mxu0 0
    %196 = vmatprep.subr.bf16.mxu0 0
    %197 = vmatpush1.bf16.msra.mxu0 0
    %198 = vmatprep.subr.bf16.mxu0 0
    %199 = vmatpush1.bf16.msra.mxu0 0
    %200 = vmatprep.subr.bf16.mxu0 0
    %201 = vmatpush1.bf16.msra.mxu0 0
    %202 = vmatprep.subr.bf16.mxu0 0
    %203 = vmatpush1.bf16.msra.mxu0 %v175
    %204 = vmatprep.subr.bf16.mxu0 0
    %205 = vmatpush1.bf16.msra.mxu0 %v174
    %206 = vmatprep.subr.bf16.mxu0 0
    %207 = vmatpush2.bf16.msra.mxu0 0
    %208 = vmatprep.subr.bf16.mxu0 0
    %209 = vmatpush2.bf16.msra.mxu0 0
    %210 = vmatprep.subr.bf16.mxu0 0
    %211 = vmatpush2.bf16.msra.mxu0 0
    %212 = vmatprep.subr.bf16.mxu0 0
    %213 = vmatpush2.bf16.msra.mxu0 0
    %214 = vmatprep.subr.bf16.mxu0 0
    %215 = vmatpush2.bf16.msra.mxu0 0
    %216 = vmatprep.subr.bf16.mxu0 0
    %217 = vmatpush2.bf16.msra.mxu0 0
    %218 = vmatprep.subr.bf16.mxu0 0
    %219 = vmatpush2.bf16.msra.mxu0 0
    %220 = vmatprep.subr.bf16.mxu0 0
    %221 = vmatpush2.bf16.msra.mxu0 0
    %222 = vmatprep.mubr.bf16.mxu0 0
    %223 = vmatmul.mubr.bf16.gmra.mxu0 %v179
    %v224 = vpop.f32.mrf.mxu0
    %v225 = vadd.f32 0.0, %v224
    %v226 = vpop.f32.mrf.mxu0
    %v227 = vpop.f32.mrf.mxu0
    %v228 = vadd.f32 0.0, %v227
    %v229 = vpop.f32.mrf.mxu0
    %230 = vmatprep.mubr.bf16.mxu0 0
    %231 = vmatmul.mubr.bf16.gmra.mxu0 %v182
    %v232 = vpop.f32.mrf.mxu0
    %v233 = vadd.f32 0.0, %v232
    %v234 = vpop.f32.mrf.mxu0
    %v235 = vpop.f32.mrf.mxu0
    %v236 = vadd.f32 0.0, %v235
    %v237 = vpop.f32.mrf.mxu0
    %238 = vmatprep.mubr.bf16.mxu0 0
    %239 = vmatmul.mubr.bf16.gmra.mxu0 %v185
    %v240 = vpop.f32.mrf.mxu0
    %v241 = vadd.f32 0.0, %v240
    %v242 = vpop.f32.mrf.mxu0
    %v243 = vpop.f32.mrf.mxu0
    %v244 = vadd.f32 0.0, %v243
    %v245 = vpop.f32.mrf.mxu0
    %246 = vmatprep.mubr.bf16.mxu0 0
    %247 = vmatmul.mubr.bf16.gmra.mxu0 %v188
    %v248 = vpop.f32.mrf.mxu0
    %v249 = vadd.f32 0.0, %v248
    %v250 = vpop.f32.mrf.mxu0
    %v251 = vpop.f32.mrf.mxu0
    %v252 = vadd.f32 0.0, %v251
    %v253 = vpop.f32.mrf.mxu0
    %254 = vdwg.mxu0
    %v255 = vadd.f32 %v225, %v145
    %v256 = vadd.f32 %v228, %v145
    %v257 = vadd.f32 %v233, %v145
    %v258 = vadd.f32 %v236, %v145
    %v259 = vadd.f32 %v241, %v145
    %v260 = vadd.f32 %v244, %v145
    %v261 = vadd.f32 %v249, %v145
    %v262 = vadd.f32 %v252, %v145
    %v263 = vtanh.pop %v255
    %v264 = vtanh.pop %v256
    %v265 = vtanh.pop %v257
    %v266 = vtanh.pop %v258
    %v267 = vtanh.pop %v259
    %v268 = vtanh.pop %v260
    %v269 = vtanh.pop %v261
    %v270 = vtanh.pop %v262
    %v271 = vld [vmem:[%s5] sm:$0x1]
    %v273 = vlaneseq
    %v274 = vshrl.u32 %v273, 7
    %v275 = vsub.s32 0, %v274
    %v276 = vrot.slane %v271, %v275
    %v278 = vmul.f32 %v263, %v276
    %v279 = vmul.f32 %v264, %v276
    %v280 = vmul.f32 %v265, %v276
    %v281 = vmul.f32 %v266, %v276
    %v282 = vmul.f32 %v267, %v276
    %v283 = vmul.f32 %v268, %v276
    %v284 = vmul.f32 %v269, %v276
    %v285 = vmul.f32 %v270, %v276
    %v286 = vsel %vm106, %v278, 0.0
    %287 = vadd.xlane.f32.xlu0 %v286
    %v288 = vpop.xlane.xlu0 %287
    %v289 = vsel %vm106, %v279, 0.0
    %290 = vadd.xlane.f32.xlu0 %v289
    %v291 = vpop.xlane.xlu0 %290
    %v292 = vsel %vm106, %v280, 0.0
    %293 = vadd.xlane.f32.xlu0 %v292
    %v294 = vpop.xlane.xlu0 %293
    %v295 = vsel %vm106, %v281, 0.0
    %296 = vadd.xlane.f32.xlu0 %v295
    %v297 = vpop.xlane.xlu0 %296
    %v298 = vsel %vm106, %v282, 0.0
    %299 = vadd.xlane.f32.xlu0 %v298
    %v300 = vpop.xlane.xlu0 %299
    %v301 = vsel %vm106, %v283, 0.0
    %302 = vadd.xlane.f32.xlu0 %v301
    %v303 = vpop.xlane.xlu0 %302
    %v304 = vsel %vm106, %v284, 0.0
    %305 = vadd.xlane.f32.xlu0 %v304
    %v306 = vpop.xlane.xlu0 %305
    %v307 = vsel %vm106, %v285, 0.0
    %308 = vadd.xlane.f32.xlu0 %v307
    %v309 = vpop.xlane.xlu0 %308
    %s310 = smul.u32 0, 8
    %v319 = vlaneseq
    %v320 = vand.u32 %v319, 127
    %v321 = vlaneseq
    %v322 = vshrl.u32 %v321, 7
    %v323 = vsub.s32 %v320, %v322
    %v324 = vrot.slane %v288, %v323
    %v325 = vlaneseq
    %v326 = vshrl.u32 %v325, 7
    %v327 = vsub.s32 %v320, %v326
    %v328 = vrot.slane %v291, %v327
    %v329 = vlaneseq
    %v330 = vshrl.u32 %v329, 7
    %v331 = vsub.s32 %v320, %v330
    %v332 = vrot.slane %v294, %v331
    %v333 = vlaneseq
    %v334 = vshrl.u32 %v333, 7
    %v335 = vsub.s32 %v320, %v334
    %v336 = vrot.slane %v297, %v335
    %v337 = vlaneseq
    %v338 = vshrl.u32 %v337, 7
    %v339 = vsub.s32 %v320, %v338
    %v340 = vrot.slane %v300, %v339
    %v341 = vlaneseq
    %v342 = vshrl.u32 %v341, 7
    %v343 = vsub.s32 %v320, %v342
    %v344 = vrot.slane %v303, %v343
    %v345 = vlaneseq
    %v346 = vshrl.u32 %v345, 7
    %v347 = vsub.s32 %v320, %v346
    %v348 = vrot.slane %v306, %v347
    %v349 = vlaneseq
    %v350 = vshrl.u32 %v349, 7
    %v351 = vsub.s32 %v320, %v350
    %v352 = vrot.slane %v309, %v351
    %vm353 = vcmask 1041409
    %v354 = vsel %vm353, %v328, %v324
    %vm355 = vcmask 1042434
    %v356 = vsel %vm355, %v332, %v354
    %vm357 = vcmask 1043459
    %v358 = vsel %vm357, %v336, %v356
    %vm359 = vcmask 1044484
    %v360 = vsel %vm359, %v340, %v358
    %vm361 = vcmask 1045509
    %v362 = vsel %vm361, %v344, %v360
    %vm363 = vcmask 1046534
    %v364 = vsel %vm363, %v348, %v362
    %vm365 = vcmask 1047559
    %v366 = vsel %vm365, %v352, %v364
    %s368 = scalar_lea.vmem [#allocation2], %s310
    %vm369 = vcmask 64512
    %370 = vst.msk [vmem:[%s368] sm:$0xff] %vm369, %v366
    %p371 = scmp.eq.s32.totalorder 0, 0
    // Predicated region
    $region46: #{tpu_custom_call.1} parent=1 // pred_check
      %p372 = pneg %p371
    $region47: #{tpu_custom_call.1} parent=1 // pred_check_branch
      %374 = sbr.rel (%p372) target = $region49
    $region48: #{tpu_custom_call.1} parent=1 // pred_region
      %v375 = vld [vmem:[%s6] sm:$0x3]
      %v376 = vunpack.c.0.s8 %v375
      %vm377 = vcmp.eq.s32.totalorder %v376, 0
      %v378 = vsel %vm377, -1e+10, 0.0
      %v379 = vld [vmem:[#allocation2] sm:$0xff]
      %v380 = vadd.f32 %v379, %v378
      %v381 = vsel %vm369, %v380, -inf
      %v382 = vrot.slane %v381, 4
      %v383 = vmax.f32 %v381, %v382
      %v384 = vrot.slane %v383, 2
      %v385 = vmax.f32 %v383, %v384
      %v386 = vrot.slane %v385, 1
      %v387 = vmax.f32 %v385, %v386
      %v388 = vsub.f32 %v380, %v387
      %v389 = vmul.f32 %v388, 1.442695
      %v390 = vpow.pop %v389
      %v391 = vsel %vm369, %v390, 0.0
      %v392 = vrot.slane %v391, 4
      %v393 = vadd.f32 %v391, %v392
      %v394 = vrot.slane %v393, 2
      %v395 = vadd.f32 %v393, %v394
      %v396 = vrot.slane %v395, 1
      %v397 = vadd.f32 %v395, %v396
      %v398 = vrcp.pop %v397
      %v399 = vmul.f32 %v390, %v398
      %400 = vst.msk [vmem:[#allocation11] sm:$0xff] %vm369, %v399
    $region49: #{tpu_custom_call.1} parent=1 // pred_fallthru
      _
    // Predicated region
    $region50: #{tpu_custom_call.1} parent=1 // pred_check
      _
    $region51: #{tpu_custom_call.1} parent=1 // pred_check_branch
      %402 = sbr.rel (0) target = $region53
    $region52: #{tpu_custom_call.1} parent=1 // pred_region
      %s404 = ssub.s32 128, 128
      %405 = vsyncadd [#allocation5], %s404
      %s407 = sshll.u32 [#allocation11], 4
      %s408 = int_to_ptr.vmem [resolvable:$true] %s407
      %410 = dma.vmem_to_hbm [thread:$0]  %s408, 128, %s7, [#allocation5]
    $region53: #{tpu_custom_call.1} parent=1 // pred_fallthru
      _
    // Predicated region
    $region54: #{tpu_custom_call.1} parent=1 // pred_check
      _
    $region55: #{tpu_custom_call.1} parent=1 // pred_check_branch
      %412 = sbr.rel (0) target = $region57
    $region56: #{tpu_custom_call.1} parent=1 // pred_region
      %413 = dma.done [#allocation5], 128
    $region57: #{tpu_custom_call.1} parent=1 // pred_fallthru
      _
    %414 = vsyncpa [#allocation4], 1
    %415 = vsyncpa [#allocation7], 1
    %416 = vsyncpa [#allocation10], 1
    %417 = vsyncpa [#allocation5], 1

</llo_original>
